<compile_context>
chip_gen: v7x
topology: tpu7x:2x2x1
jax: 0.10.0
libtpu: 0.0.40
codegen_flags: <defaults>
</compile_context>

<pallas_src>
import functools

import jax
import jax.numpy as jnp
from jax.experimental import pallas as pl
from jax.experimental.pallas import tpu as pltpu


def conv_bn_silu_kernel(x_ref, w_ref, scale_ref, shift_ref, o_ref, *, tH, W, K, p):
    """Grid = (batch, row_tile).

    x_ref     : (1, H+2p, W+2p, C_in)   whole zero-padded image (block index is
                                        constant across row tiles -> fetched once
                                        per batch element)
    w_ref     : (K*K*C_in, C_out_pad)   im2col-flattened weights, lane-dense C_out
    scale_ref : (1, C_out_pad)          gamma / sqrt(var + eps)          (f32)
    shift_ref : (1, C_out_pad)          beta - mean * scale              (f32)
    o_ref     : (1, tH, W, C_out_pad)   one NHWC row tile of the output
    """
    t = pl.program_id(1)
    row0 = pl.multiple_of(t * tH, tH)
    # (tH + 2p, W + 2p, C_in) window including the halo rows for this row tile.
    x_tile = x_ref[0, pl.ds(row0, tH + 2 * p), :, :]

    # im2col: fuse the K*K shifted taps into a single (tH*W, K*K*C_in) operand so
    # the MXU sees one wide contraction instead of K*K skinny ones.  Tap order
    # (dy, dx, c_in) matches the wrapper's weight reshape.
    taps = []
    for dy in range(K):
        for dx in range(K):
            taps.append(x_tile[dy:dy + tH, dx:dx + W, :])
    patches = jnp.concatenate(taps, axis=-1)                 # (tH, W, K*K*C_in)
    patches = patches.reshape(tH * W, patches.shape[-1])     # (M, K*K*C_in)

    acc = jnp.dot(patches, w_ref[...],
                  preferred_element_type=jnp.float32)        # (M, C_out_pad) f32

    # Eval-mode BatchNorm (folded to scale/shift) + SiLU on the 2-D view.
    y = acc * scale_ref[...] + shift_ref[...]
    y = y * jax.nn.sigmoid(y)

    o_ref[...] = y.reshape(o_ref.shape).astype(o_ref.dtype)


def _pick_row_tile(H, W, target_rows=128):
    """Largest divisor tH of H with tH * W <= target_rows (falls back to 1)."""
    for cand in range(H, 0, -1):
        if H % cand == 0 and cand * W <= target_rows:
            return cand
    return 1


def conv_forward(x_nchw, weight_oihw, gamma, beta, running_mean, running_var,
                 *, eps=1e-5):
    """Equivalent of Conv.forward (eval-mode BatchNorm). stride=1, groups=1, odd k."""
    B, C_in, H, W = x_nchw.shape
    C_out, _, K, _ = weight_oihw.shape
    p = K // 2                                       # autopad
    LANE = 128
    C_out_pad = -(-C_out // LANE) * LANE             # lane-dense output channels

    # ---- wrapper glue (plain JAX): layout, halo padding, BN folding ------------
    # TODO(synk): fold the NCHW<->NHWC transposes and the halo zero-padding into the
    # kernel (in-VMEM halo masking) to remove the extra HBM passes at large sizes.
    x = jnp.transpose(x_nchw, (0, 2, 3, 1))                      # NCHW -> NHWC
    x_pad = jnp.pad(x, ((0, 0), (p, p), (p, p), (0, 0)))
    Hp, Wp = H + 2 * p, W + 2 * p

    # OIHW -> (K, K, C_in, C_out) -> (K*K*C_in, C_out_pad); row order (dy, dx, c_in)
    # matches the in-kernel im2col concatenation order.
    w = jnp.transpose(weight_oihw, (2, 3, 1, 0)).reshape(K * K * C_in, C_out)
    w = jnp.pad(w, ((0, 0), (0, C_out_pad - C_out)))

    inv_std = 1.0 / jnp.sqrt(running_var.astype(jnp.float32) + eps)
    scale = gamma.astype(jnp.float32) * inv_std
    shift = beta.astype(jnp.float32) - running_mean.astype(jnp.float32) * scale
    scale = jnp.pad(scale, (0, C_out_pad - C_out)).reshape(1, C_out_pad)
    shift = jnp.pad(shift, (0, C_out_pad - C_out)).reshape(1, C_out_pad)

    tH = _pick_row_tile(H, W)
    n_t = H // tH

    kernel = functools.partial(conv_bn_silu_kernel, tH=tH, W=W, K=K, p=p)

    itemsize = jnp.dtype(x_nchw.dtype).itemsize
    cost = pl.CostEstimate(
        flops=2 * B * H * W * K * K * C_in * C_out_pad,
        transcendentals=B * H * W * C_out_pad,
        bytes_accessed=(x_pad.size * itemsize
                        + w.size * jnp.dtype(w.dtype).itemsize
                        + B * H * W * C_out_pad * itemsize),
    )

    out_nhwc = pl.pallas_call(
        kernel,
        out_shape=jax.ShapeDtypeStruct((B, H, W, C_out_pad), x_nchw.dtype),
        grid=(B, n_t),
        in_specs=[
            # Full padded image per batch; block index constant across row tiles, so
            # it is only re-DMA'd when the batch index changes.
            pl.BlockSpec((1, Hp, Wp, C_in), lambda b, t: (b, 0, 0, 0)),
            pl.BlockSpec((K * K * C_in, C_out_pad), lambda b, t: (0, 0)),
            pl.BlockSpec((1, C_out_pad), lambda b, t: (0, 0)),
            pl.BlockSpec((1, C_out_pad), lambda b, t: (0, 0)),
        ],
        out_specs=pl.BlockSpec((1, tH, W, C_out_pad), lambda b, t: (b, t, 0, 0)),
        compiler_params=pltpu.CompilerParams(
            # Both grid axes are fully independent (each output tile written once),
            # so they can be sharded across v7x's two TensorCores.
            dimension_semantics=("parallel", "parallel"),
            vmem_limit_bytes=32 * 1024 * 1024,
        ),
        cost_estimate=cost,
    )(x_pad, w, scale, shift)

    # Drop padded channels, back to NCHW.
    return jnp.transpose(out_nhwc[..., :C_out], (0, 3, 1, 2))


def _reference(x, w, gamma, beta, mean, var, eps=1e-5):
    y = jax.lax.conv_general_dilated(
        x, w, window_strides=(1, 1), padding=[(1, 1), (1, 1)],
        dimension_numbers=("NCHW", "OIHW", "NCHW"))
    scale = (gamma / jnp.sqrt(var + eps)).reshape(1, -1, 1, 1)
    shift = (beta - mean * gamma / jnp.sqrt(var + eps)).reshape(1, -1, 1, 1)
    y = y * scale + shift
    return y * jax.nn.sigmoid(y)


if __name__ == "__main__":
    key = jax.random.PRNGKey(0)
    kx, kw, kg, kb, km, kv = jax.random.split(key, 6)

    B, C1, C2, H, W, K = 2, 4, 8, 16, 16, 3
    x = jax.random.normal(kx, (B, C1, H, W), jnp.float32)
    weight = 0.1 * jax.random.normal(kw, (C2, C1, K, K), jnp.float32)
    gamma = 1.0 + 0.1 * jax.random.normal(kg, (C2,), jnp.float32)
    beta = 0.1 * jax.random.normal(kb, (C2,), jnp.float32)
    running_mean = 0.1 * jax.random.normal(km, (C2,), jnp.float32)
    running_var = jnp.abs(jax.random.normal(kv, (C2,), jnp.float32)) + 0.5

    out = conv_forward(x, weight, gamma, beta, running_mean, running_var)
    out = jax.block_until_ready(out)

    ref = _reference(x, weight, gamma, beta, running_mean, running_var)
    assert out.shape == (B, C2, H, W)
    assert jnp.allclose(out, ref, atol=1e-4, rtol=1e-4), "mismatch vs reference"
    # TODO(synk): training-mode BatchNorm (batch statistics), stride>1, groups>1 and
    # even kernel sizes are not implemented; eval-mode running-stats fusion only.
    print("KERNEL_OK")
</pallas_src>

<mosaic_0001>
module attributes {stable_mosaic.version = 11 : i64} {
  func.func @conv_bn_silu_kernel(%arg0: i32, %arg1: i32, %arg2: memref<1x18x18x4xf32, #tpu.memory_space<vmem>>, %arg3: memref<36x128xf32, #tpu.memory_space<vmem>>, %arg4: memref<1x128xf32, #tpu.memory_space<vmem>>, %arg5: memref<1x128xf32, #tpu.memory_space<vmem>>, %arg6: memref<1x8x16x128xf32, #tpu.memory_space<vmem>>) attributes {dimension_semantics = [#tpu.dimension_semantics<parallel>, #tpu.dimension_semantics<parallel>], iteration_bounds = array<i64: 2, 2>, scalar_prefetch = 0 : i64, scratch_operands = 0 : i64, tpu.core_type = #tpu.core_type<tc>, window_params = [{transform_indices = @transform_0, window_bounds = array<i64: 1, 18, 18, 4>}, {pipeline_mode = #tpu.pipeline_mode<synchronous>, transform_indices = @transform_1, window_bounds = array<i64: 36, 128>}, {pipeline_mode = #tpu.pipeline_mode<synchronous>, transform_indices = @transform_2, window_bounds = array<i64: 1, 128>}, {pipeline_mode = #tpu.pipeline_mode<synchronous>, transform_indices = @transform_3, window_bounds = array<i64: 1, 128>}, {transform_indices = @transform_4, window_bounds = array<i64: 1, 8, 16, 128>}]} {
    %c8_i32 = arith.constant 8 : i32
    %0 = arith.muli %arg1, %c8_i32 : i32
    %1 = tpu.assume_multiple %0, 8 : i32
    %c0 = arith.constant 0 : index
    %2 = arith.index_cast %1 : i32 to index
    %c0_0 = arith.constant 0 : index
    %c0_1 = arith.constant 0 : index
    %3 = vector.load %arg2[%c0, %2, %c0_0, %c0_1] : memref<1x18x18x4xf32, #tpu.memory_space<vmem>>, vector<1x10x18x4xf32>
    %4 = vector.shape_cast %3 : vector<1x10x18x4xf32> to vector<10x18x4xf32>
    %5 = vector.extract_strided_slice %4 {offsets = [0, 0, 0], sizes = [8, 16, 4], strides = [1, 1, 1]} : vector<10x18x4xf32> to vector<8x16x4xf32>
    %6 = vector.extract_strided_slice %4 {offsets = [0, 1, 0], sizes = [8, 16, 4], strides = [1, 1, 1]} : vector<10x18x4xf32> to vector<8x16x4xf32>
    %7 = vector.extract_strided_slice %4 {offsets = [0, 2, 0], sizes = [8, 16, 4], strides = [1, 1, 1]} : vector<10x18x4xf32> to vector<8x16x4xf32>
    %8 = vector.extract_strided_slice %4 {offsets = [1, 0, 0], sizes = [8, 16, 4], strides = [1, 1, 1]} : vector<10x18x4xf32> to vector<8x16x4xf32>
    %9 = vector.extract_strided_slice %4 {offsets = [1, 1, 0], sizes = [8, 16, 4], strides = [1, 1, 1]} : vector<10x18x4xf32> to vector<8x16x4xf32>
    %10 = vector.extract_strided_slice %4 {offsets = [1, 2, 0], sizes = [8, 16, 4], strides = [1, 1, 1]} : vector<10x18x4xf32> to vector<8x16x4xf32>
    %11 = vector.extract_strided_slice %4 {offsets = [2, 0, 0], sizes = [8, 16, 4], strides = [1, 1, 1]} : vector<10x18x4xf32> to vector<8x16x4xf32>
    %12 = vector.extract_strided_slice %4 {offsets = [2, 1, 0], sizes = [8, 16, 4], strides = [1, 1, 1]} : vector<10x18x4xf32> to vector<8x16x4xf32>
    %13 = vector.extract_strided_slice %4 {offsets = [2, 2, 0], sizes = [8, 16, 4], strides = [1, 1, 1]} : vector<10x18x4xf32> to vector<8x16x4xf32>
    %14 = tpu.concatenate %5, %6, %7, %8, %9, %10, %11, %12, %13 in 2 : vector<8x16x4xf32>, vector<8x16x4xf32>, vector<8x16x4xf32>, vector<8x16x4xf32>, vector<8x16x4xf32>, vector<8x16x4xf32>, vector<8x16x4xf32>, vector<8x16x4xf32>, vector<8x16x4xf32> -> vector<8x16x36xf32>
    %15 = vector.shape_cast %14 : vector<8x16x36xf32> to vector<128x36xf32>
    %c0_2 = arith.constant 0 : index
    %c0_3 = arith.constant 0 : index
    %16 = vector.load %arg3[%c0_2, %c0_3] : memref<36x128xf32, #tpu.memory_space<vmem>>, vector<36x128xf32>
    %cst = arith.constant dense<0.000000e+00> : vector<128x128xf32>
    %17 = tpu.matmul %15, %16, %cst {dimension_numbers = #tpu.dot_dimension_numbers<[1], [0], [0], [1], [0, 0, 1, 1], [], []>} : vector<128x36xf32>, vector<36x128xf32>, vector<128x128xf32> -> vector<128x128xf32>
    %c0_4 = arith.constant 0 : index
    %c0_5 = arith.constant 0 : index
    %18 = vector.load %arg4[%c0_4, %c0_5] : memref<1x128xf32, #tpu.memory_space<vmem>>, vector<1x128xf32>
    %19 = vector.broadcast %18 : vector<1x128xf32> to vector<128x128xf32>
    %20 = arith.mulf %17, %19 : vector<128x128xf32>
    %c0_6 = arith.constant 0 : index
    %c0_7 = arith.constant 0 : index
    %21 = vector.load %arg5[%c0_6, %c0_7] : memref<1x128xf32, #tpu.memory_space<vmem>>, vector<1x128xf32>
    %22 = vector.broadcast %21 : vector<1x128xf32> to vector<128x128xf32>
    %23 = arith.addf %20, %22 : vector<128x128xf32>
    %24 = arith.negf %23 : vector<128x128xf32>
    %25 = math.exp %24 : vector<128x128xf32>
    %cst_8 = arith.constant 1.000000e+00 : f32
    %26 = vector.broadcast %cst_8 : f32 to vector<128x128xf32>
    %27 = arith.addf %26, %25 : vector<128x128xf32>
    %28 = arith.divf %26, %27 : vector<128x128xf32>
    %29 = arith.mulf %23, %28 : vector<128x128xf32>
    %30 = vector.shape_cast %29 : vector<128x128xf32> to vector<1x8x16x128xf32>
    %c0_9 = arith.constant 0 : index
    %c0_10 = arith.constant 0 : index
    %c0_11 = arith.constant 0 : index
    %c0_12 = arith.constant 0 : index
    %31 = vector.load %arg6[%c0_9, %c0_10, %c0_11, %c0_12] : memref<1x8x16x128xf32, #tpu.memory_space<vmem>>, vector<1x8x16x128xf32>
    tpu.vector_store %arg6[%c0_9, %c0_10, %c0_11, %c0_12], %30 {strides = array<i32>} : memref<1x8x16x128xf32, #tpu.memory_space<vmem>>, vector<1x8x16x128xf32>,
    return
  }
  func.func @transform_0(%arg0: i32, %arg1: i32) -> (i32, i32, i32, i32) {
    %c0_i32 = arith.constant 0 : i32
    %c0_i32_0 = arith.constant 0 : i32
    %c0_i32_1 = arith.constant 0 : i32
    %c0_i32_2 = arith.constant 0 : i32
    return %arg0, %c0_i32, %c0_i32_0, %c0_i32_1 : i32, i32, i32, i32
  }
  func.func @transform_1(%arg0: i32, %arg1: i32) -> (i32, i32) {
    %c0_i32 = arith.constant 0 : i32
    %c0_i32_0 = arith.constant 0 : i32
    %c0_i32_1 = arith.constant 0 : i32
    return %c0_i32, %c0_i32_0 : i32, i32
  }
  func.func @transform_2(%arg0: i32, %arg1: i32) -> (i32, i32) {
    %c0_i32 = arith.constant 0 : i32
    %c0_i32_0 = arith.constant 0 : i32
    %c0_i32_1 = arith.constant 0 : i32
    return %c0_i32, %c0_i32_0 : i32, i32
  }
  func.func @transform_3(%arg0: i32, %arg1: i32) -> (i32, i32) {
    %c0_i32 = arith.constant 0 : i32
    %c0_i32_0 = arith.constant 0 : i32
    %c0_i32_1 = arith.constant 0 : i32
    return %c0_i32, %c0_i32_0 : i32, i32
  }
  func.func @transform_4(%arg0: i32, %arg1: i32) -> (i32, i32, i32, i32) {
    %c0_i32 = arith.constant 0 : i32
    %c0_i32_0 = arith.constant 0 : i32
    %c0_i32_1 = arith.constant 0 : i32
    return %arg0, %arg1, %c0_i32, %c0_i32_0 : i32, i32, i32, i32
  }
}

</mosaic_0001>

<llo_original>
// kernel: tpu_custom_call.1
$region0: #{tpu_custom_call.1}
  #allocation0 [shape = 'u32[]', space=smem, size = 0x4, offset = 0x4, fixed_abs, tag = 'smem constant byte address 0x4 - core index']
  #allocation1 [shape = 'u32[144,128]{1,0:T(1,128)}', space=vmem, size = 0x12000, scoped, tag = 'internal scratch']
  %s0 = inlined_call_operand.vmem [shape: f32[2,18,18,4], index: 0, kind: input, shape index: {}]
  %s1 = inlined_call_operand.vmem [shape: f32[36,128], index: 1, kind: input, shape index: {}]
  %s2 = inlined_call_operand.vmem [shape: f32[1,128], index: 2, kind: input, shape index: {}]
  %s3 = inlined_call_operand.vmem [shape: f32[1,128], index: 3, kind: input, shape index: {}]
  %s4 = inlined_call_operand.hbm [shape: f32[2,16,16,128], index: 4, kind: output, shape index: {}]
  %s5 = sld [smem:[#allocation0]]
  $region49: #{tpu_custom_call.1} parent=0
    _
  %s7 = ssub.s32 1, %s5
  %s8 = scalar_select 0, %s7, %s5
  $region1: #{tpu_custom_call.1} parent=0
    #allocation2 [shape = 'u8[131072]{0}', space=vmem, size = 0x20000, scoped, tag = 'output window, operand 0']
    #allocation3 [shape = 's32[2]{0}', space=sflag, size = 0x8, scoped, tag = 'scoped memory for tpu_custom_call.1']
    %9 = vsyncpa [#allocation3], 0
    %s10 = scalar_lea.sflag [#allocation3], 1
    %11 = vsyncpa %s10, 0
    loop: start=0, step=1, limit=6
    $region2: #{tpu_custom_call.1} parent=1 // loop_pre_header
      _
    $region3: #{tpu_custom_call.1} parent=1 // loop_header
      %s13 = sphi 0, %s17
      %p14 = scmp.ge.s32.totalorder %s13, 6
      %s20 = sphi 0, %s32
      %s21 = sphi 0, %s28
      %s22 = sphi 0, %s20
      %s23 = sphi 0, %s21
      %s24 = sphi 0, %s22
      %s25 = sphi 0, %s23
      %s35 = sphi 0, %s37
      %s38 = sphi 0, %s35
      %s39 = sphi 0, %s38
      %s55 = sphi 0, %s39
      %s59 = sphi 0, %s59
      %s61 = sphi 0, %s59
      %s62 = sphi 0, %s61
      %s76 = sphi 0, %s62
      %s80 = sphi 0, %s80
      %s82 = sphi 0, %s80
      %s83 = sphi 0, %s82
      %s97 = sphi 0, %s83
      %s101 = sphi 0, %s101
      %s103 = sphi 0, %s101
      %s104 = sphi 0, %s103
      %s118 = sphi 0, %s104
      %s126 = sphi 0, %s128
      %s129 = sphi 0, %s126
      %s130 = sphi 0, %s129
      %s146 = sphi 0, %s130
    $region4: #{tpu_custom_call.1} parent=1 // loop_header_branch
      %16 = sbr.rel (%p14) target = $region8
    $region5: #{tpu_custom_call.1} parent=1 // loop_body
      %s18 = ssub.s32 %s13, 1
      %s19 = ssub.s32 %s13, 2
      %s26 = sadd.s32 1, %s21
      %p27 = scmp.ge.s32.totalorder %s26, 2
      %s28 = scalar_select %p27, 0, %s26
      %s29 = sadd.s32 1, %s20
      %s30 = scalar_select %p27, %s29, %s20
      %p31 = scmp.ge.s32.totalorder %s30, 2
      %s32 = scalar_select %p31, 0, %s30
      %s33 = ssub.s32 %s20, %s32
      %p34 = scmp.eq.s32.totalorder %s33, 0
      %s36 = sadd.s32 %s35, 1
      %s37 = scalar_select %p34, %s35, %s36
      %p40 = pneg %p34
      %p41 = scmp.eq.s32.totalorder %s13, 3
      %p42 = por %p40, %p41
      %p43 = scmp.ne.s32.totalorder %s35, %s38
      %p44 = scmp.eq.s32.totalorder %s13, 0
      %p45 = por %p43, %p44
      %p46 = scmp.ne.s32.totalorder %s35, %s38
      %p47 = scmp.eq.s32.totalorder %s18, 3
      %p48 = por %p46, %p47
      %p49 = scmp.ne.s32.totalorder %s38, %s39
      %p50 = scmp.eq.s32.totalorder %s18, 0
      %p51 = por %p49, %p50
      %p52 = scmp.ne.s32.totalorder %s38, %s39
      %p53 = scmp.eq.s32.totalorder %s19, 3
      %p54 = por %p52, %p53
      %p56 = scmp.ne.s32.totalorder %s39, %s55
      %p57 = scmp.eq.s32.totalorder %s19, 0
      %p58 = por %p56, %p57
      %s60 = sadd.s32 %s59, 1
      %p63 = scmp.eq.s32.totalorder %s13, 3
      %p64 = scmp.ne.s32.totalorder %s59, %s61
      %p65 = scmp.eq.s32.totalorder %s13, 0
      %p66 = por %p64, %p65
      %p67 = scmp.ne.s32.totalorder %s59, %s61
      %p68 = scmp.eq.s32.totalorder %s18, 3
      %p69 = por %p67, %p68
      %p70 = scmp.ne.s32.totalorder %s61, %s62
      %p71 = scmp.eq.s32.totalorder %s18, 0
      %p72 = por %p70, %p71
      %p73 = scmp.ne.s32.totalorder %s61, %s62
      %p74 = scmp.eq.s32.totalorder %s19, 3
      %p75 = por %p73, %p74
      %p77 = scmp.ne.s32.totalorder %s62, %s76
      %p78 = scmp.eq.s32.totalorder %s19, 0
      %p79 = por %p77, %p78
      %s81 = sadd.s32 %s80, 1
      %p84 = scmp.eq.s32.totalorder %s13, 3
      %p85 = scmp.ne.s32.totalorder %s80, %s82
      %p86 = scmp.eq.s32.totalorder %s13, 0
      %p87 = por %p85, %p86
      %p88 = scmp.ne.s32.totalorder %s80, %s82
      %p89 = scmp.eq.s32.totalorder %s18, 3
      %p90 = por %p88, %p89
      %p91 = scmp.ne.s32.totalorder %s82, %s83
      %p92 = scmp.eq.s32.totalorder %s18, 0
      %p93 = por %p91, %p92
      %p94 = scmp.ne.s32.totalorder %s82, %s83
      %p95 = scmp.eq.s32.totalorder %s19, 3
      %p96 = por %p94, %p95
      %p98 = scmp.ne.s32.totalorder %s83, %s97
      %p99 = scmp.eq.s32.totalorder %s19, 0
      %p100 = por %p98, %p99
      %s102 = sadd.s32 %s101, 1
      %p105 = scmp.eq.s32.totalorder %s13, 3
      %p106 = scmp.ne.s32.totalorder %s101, %s103
      %p107 = scmp.eq.s32.totalorder %s13, 0
      %p108 = por %p106, %p107
      %p109 = scmp.ne.s32.totalorder %s101, %s103
      %p110 = scmp.eq.s32.totalorder %s18, 3
      %p111 = por %p109, %p110
      %p112 = scmp.ne.s32.totalorder %s103, %s104
      %p113 = scmp.eq.s32.totalorder %s18, 0
      %p114 = por %p112, %p113
      %p115 = scmp.ne.s32.totalorder %s103, %s104
      %p116 = scmp.eq.s32.totalorder %s19, 3
      %p117 = por %p115, %p116
      %p119 = scmp.ne.s32.totalorder %s104, %s118
      %p120 = scmp.eq.s32.totalorder %s19, 0
      %p121 = por %p119, %p120
      %s122 = ssub.s32 %s20, %s32
      %s123 = ssub.s32 %s21, %s28
      %s124 = sor.u32 %s122, %s123
      %p125 = scmp.eq.s32.totalorder %s124, 0
      %s127 = sadd.s32 %s126, 1
      %s128 = scalar_select %p125, %s126, %s127
      %p131 = pneg %p125
      %p132 = scmp.eq.s32.totalorder %s13, 3
      %p133 = por %p131, %p132
      %p134 = scmp.ne.s32.totalorder %s126, %s129
      %p135 = scmp.eq.s32.totalorder %s13, 0
      %p136 = por %p134, %p135
      %p137 = scmp.ne.s32.totalorder %s126, %s129
      %p138 = scmp.eq.s32.totalorder %s18, 3
      %p139 = por %p137, %p138
      %p140 = scmp.ne.s32.totalorder %s129, %s130
      %p141 = scmp.eq.s32.totalorder %s18, 0
      %p142 = por %p140, %p141
      %p143 = scmp.ne.s32.totalorder %s129, %s130
      %p144 = scmp.eq.s32.totalorder %s19, 3
      %p145 = por %p143, %p144
      %p147 = scmp.ne.s32.totalorder %s130, %s146
      %p148 = scmp.eq.s32.totalorder %s19, 0
      %p149 = por %p147, %p148
      %p150 = scmp.le.s32.totalorder 1, %s13
      %p151 = scmp.lt.s32.totalorder %s13, 5
      %p152 = pnand %p150, %p151
      %p153 = pneg %p152
      // Predicated region
      $region9: #{tpu_custom_call.1} parent=5 // pred_check
        _
      $region10: #{tpu_custom_call.1} parent=5 // pred_check_branch
        %155 = sbr.rel (%p152) target = $region12
      $region11: #{tpu_custom_call.1} parent=5 // pred_region
        %s156 = ssub.s32 %s13, 1
        // Predicated region
        $region13: #{tpu_custom_call.1} parent=11 // pred_check
          %p157 = pneg %p72
        $region14: #{tpu_custom_call.1} parent=11 // pred_check_branch
          %159 = sbr.rel (%p157) target = $region16
        $region15: #{tpu_custom_call.1} parent=11 // pred_region
          _
        $region16: #{tpu_custom_call.1} parent=11 // pred_fallthru
          _
        // Predicated region
        $region17: #{tpu_custom_call.1} parent=11 // pred_check
          %p160 = pneg %p93
        $region18: #{tpu_custom_call.1} parent=11 // pred_check_branch
          %162 = sbr.rel (%p160) target = $region20
        $region19: #{tpu_custom_call.1} parent=11 // pred_region
          _
        $region20: #{tpu_custom_call.1} parent=11 // pred_fallthru
          _
        // Predicated region
        $region21: #{tpu_custom_call.1} parent=11 // pred_check
          %p163 = pneg %p114
        $region22: #{tpu_custom_call.1} parent=11 // pred_check_branch
          %165 = sbr.rel (%p163) target = $region24
        $region23: #{tpu_custom_call.1} parent=11 // pred_region
          _
        $region24: #{tpu_custom_call.1} parent=11 // pred_fallthru
          _
      $region12: #{tpu_custom_call.1} parent=5 // pred_fallthru
        _
      %p166 = scmp.lt.s32.totalorder %s13, 4
      // Predicated region
      $region25: #{tpu_custom_call.1} parent=5 // pred_check
        %p167 = pneg %p166
      $region26: #{tpu_custom_call.1} parent=5 // pred_check_branch
        %169 = sbr.rel (%p167) target = $region28
      $region27: #{tpu_custom_call.1} parent=5 // pred_region
        // Predicated region
        $region29: #{tpu_custom_call.1} parent=27 // pred_check
          %p170 = pneg %p45
        $region30: #{tpu_custom_call.1} parent=27 // pred_check_branch
          %172 = sbr.rel (%p170) target = $region32
        $region31: #{tpu_custom_call.1} parent=27 // pred_region
          %p173 = scmp.lt.s32.totalorder %s20, 1
          %s174 = scalar_select %p173, %s20, 1
          %s175 = smul.addr %s174, 54
          %s176 = smul.addr %s175, 8
          %s177 = scalar_lea.vmem %s0, %s176
        $region32: #{tpu_custom_call.1} parent=27 // pred_fallthru
          _
      $region28: #{tpu_custom_call.1} parent=5 // pred_fallthru
        _
      %p178 = scmp.le.s32.totalorder 1, %s13
      %p179 = scmp.lt.s32.totalorder %s13, 5
      %p180 = pnand %p178, %p179
      %p181 = pneg %p180
      // Predicated region
      $region33: #{tpu_custom_call.1} parent=5 // pred_check
        _
      $region34: #{tpu_custom_call.1} parent=5 // pred_check_branch
        %183 = sbr.rel (%p180) target = $region36
      $region35: #{tpu_custom_call.1} parent=5 // pred_region
        %s184 = ssub.s32 %s13, 1
        %p185 = scmp.lt.s32.totalorder %s22, 1
        %s186 = scalar_select %p185, %s22, 1
        %s187 = smul.addr %s186, 54
        %s188 = smul.addr %s187, 8
        %s189 = scalar_lea.vmem %s0, %s188
        %p190 = pneg %p51
        %p191 = pneg %p48
        %p192 = pneg %p72
        %p193 = pneg %p69
        %p194 = pneg %p93
        %p195 = pneg %p90
        %p196 = pneg %p114
        %p197 = pneg %p111
        %p198 = pneg %p142
        %p199 = pneg %p139
        %s200 = sand.u32 %s129, 1
        %s201 = scalar_lea.sflag [#allocation3], %s200
        %s202 = sand.u32 %s129, 1
        %s203 = smul.addr %s202, 128
        %s204 = scalar_lea.vmem [#allocation2], %s203
        %p205 = scmp.lt.s32.totalorder %s22, 1
        %s206 = scalar_select %p205, %s22, 1
        %s207 = smul.addr %s206, 54
        %s208 = smul.addr %s207, 8
        %s209 = scalar_lea.vmem %s0, %s208
        %s210 = smul.u32 8, %s23
        %s211 = smul.u32 %s23, 8
        %s212 = smul.u32 %s211, 24
        %s213 = scalar_lea.vmem %s209, %s212
        %v214 = vld [vmem:[%s213] sm:$0xff]
        %v215 = vld [vmem:[%s213 + $0x8] sm:$0xff]
        %v216 = vld [vmem:[%s213 + $0x10] sm:$0x3]
        %v217 = vld [vmem:[%s213 + $0x18] sm:$0xff]
        %v218 = vld [vmem:[%s213 + $0x20] sm:$0xff]
        %v219 = vld [vmem:[%s213 + $0x28] sm:$0x3]
        %v220 = vld [vmem:[%s213 + $0x30] sm:$0xff]
        %v221 = vld [vmem:[%s213 + $0x38] sm:$0xff]
        %v222 = vld [vmem:[%s213 + $0x40] sm:$0x3]
        %v223 = vld [vmem:[%s213 + $0x48] sm:$0xff]
        %v224 = vld [vmem:[%s213 + $0x50] sm:$0xff]
        %v225 = vld [vmem:[%s213 + $0x58] sm:$0x3]
        %v226 = vld [vmem:[%s213 + $0x60] sm:$0xff]
        %v227 = vld [vmem:[%s213 + $0x68] sm:$0xff]
        %v228 = vld [vmem:[%s213 + $0x70] sm:$0x3]
        %v229 = vld [vmem:[%s213 + $0x78] sm:$0xff]
        %v230 = vld [vmem:[%s213 + $0x80] sm:$0xff]
        %v231 = vld [vmem:[%s213 + $0x88] sm:$0x3]
        %v232 = vld [vmem:[%s213 + $0x90] sm:$0xff]
        %v233 = vld [vmem:[%s213 + $0x98] sm:$0xff]
        %v234 = vld [vmem:[%s213 + $0xa0] sm:$0x3]
        %v235 = vld [vmem:[%s213 + $0xa8] sm:$0xff]
        %v236 = vld [vmem:[%s213 + $0xb0] sm:$0xff]
        %v237 = vld [vmem:[%s213 + $0xb8] sm:$0x3]
        %v238 = vld [vmem:[%s213 + $0xc0] sm:$0xff]
        %v239 = vld [vmem:[%s213 + $0xc8] sm:$0xff]
        %v240 = vld [vmem:[%s213 + $0xd0] sm:$0x3]
        %v241 = vld [vmem:[%s213 + $0xd8] sm:$0xff]
        %v242 = vld [vmem:[%s213 + $0xe0] sm:$0xff]
        %v243 = vld [vmem:[%s213 + $0xe8] sm:$0x3]
        %vm268 = vcmask 1046528
        %v269 = vrot.slane %v214, 1
        %v270 = vrot.slane %v215, 1
        %v271 = vsel %vm268, %v269, %v270
        %v272 = vrot.slane %v216, 1
        %v273 = vsel %vm268, %v270, %v272
        %v274 = vrot.slane %v217, 1
        %v275 = vrot.slane %v218, 1
        %v276 = vsel %vm268, %v274, %v275
        %v277 = vrot.slane %v219, 1
        %v278 = vsel %vm268, %v275, %v277
        %v279 = vrot.slane %v220, 1
        %v280 = vrot.slane %v221, 1
        %v281 = vsel %vm268, %v279, %v280
        %v282 = vrot.slane %v222, 1
        %v283 = vsel %vm268, %v280, %v282
        %v284 = vrot.slane %v223, 1
        %v285 = vrot.slane %v224, 1
        %v286 = vsel %vm268, %v284, %v285
        %v287 = vrot.slane %v225, 1
        %v288 = vsel %vm268, %v285, %v287
        %v289 = vrot.slane %v226, 1
        %v290 = vrot.slane %v227, 1
        %v291 = vsel %vm268, %v289, %v290
        %v292 = vrot.slane %v228, 1
        %v293 = vsel %vm268, %v290, %v292
        %v294 = vrot.slane %v229, 1
        %v295 = vrot.slane %v230, 1
        %v296 = vsel %vm268, %v294, %v295
        %v297 = vrot.slane %v231, 1
        %v298 = vsel %vm268, %v295, %v297
        %v299 = vrot.slane %v232, 1
        %v300 = vrot.slane %v233, 1
        %v301 = vsel %vm268, %v299, %v300
        %v302 = vrot.slane %v234, 1
        %v303 = vsel %vm268, %v300, %v302
        %v304 = vrot.slane %v235, 1
        %v305 = vrot.slane %v236, 1
        %v306 = vsel %vm268, %v304, %v305
        %v307 = vrot.slane %v237, 1
        %v308 = vsel %vm268, %v305, %v307
        %309 = vrot.lane.b32.xlu0 %v271, 4
        %v310 = vpop.permute.xlu0 %309
        %311 = vrot.lane.b32.xlu0 %v273, 4
        %v312 = vpop.permute.xlu0 %311
        %313 = vrot.lane.b32.xlu0 %v276, 4
        %v314 = vpop.permute.xlu0 %313
        %315 = vrot.lane.b32.xlu0 %v278, 4
        %v316 = vpop.permute.xlu0 %315
        %317 = vrot.lane.b32.xlu0 %v281, 4
        %v318 = vpop.permute.xlu0 %317
        %319 = vrot.lane.b32.xlu0 %v283, 4
        %v320 = vpop.permute.xlu0 %319
        %321 = vrot.lane.b32.xlu0 %v286, 4
        %v322 = vpop.permute.xlu0 %321
        %323 = vrot.lane.b32.xlu0 %v288, 4
        %v324 = vpop.permute.xlu0 %323
        %325 = vrot.lane.b32.xlu0 %v291, 4
        %v326 = vpop.permute.xlu0 %325
        %327 = vrot.lane.b32.xlu0 %v293, 4
        %v328 = vpop.permute.xlu0 %327
        %329 = vrot.lane.b32.xlu0 %v296, 4
        %v330 = vpop.permute.xlu0 %329
        %331 = vrot.lane.b32.xlu0 %v298, 4
        %v332 = vpop.permute.xlu0 %331
        %333 = vrot.lane.b32.xlu0 %v301, 4
        %v334 = vpop.permute.xlu0 %333
        %335 = vrot.lane.b32.xlu0 %v303, 4
        %v336 = vpop.permute.xlu0 %335
        %337 = vrot.lane.b32.xlu0 %v306, 4
        %v338 = vpop.permute.xlu0 %337
        %339 = vrot.lane.b32.xlu0 %v308, 4
        %v340 = vpop.permute.xlu0 %339
        %vm357 = vcmask 1045504
        %v358 = vrot.slane %v214, 2
        %v359 = vrot.slane %v215, 2
        %v360 = vsel %vm357, %v358, %v359
        %v361 = vrot.slane %v216, 2
        %v362 = vsel %vm357, %v359, %v361
        %v363 = vrot.slane %v217, 2
        %v364 = vrot.slane %v218, 2
        %v365 = vsel %vm357, %v363, %v364
        %v366 = vrot.slane %v219, 2
        %v367 = vsel %vm357, %v364, %v366
        %v368 = vrot.slane %v220, 2
        %v369 = vrot.slane %v221, 2
        %v370 = vsel %vm357, %v368, %v369
        %v371 = vrot.slane %v222, 2
        %v372 = vsel %vm357, %v369, %v371
        %v373 = vrot.slane %v223, 2
        %v374 = vrot.slane %v224, 2
        %v375 = vsel %vm357, %v373, %v374
        %v376 = vrot.slane %v225, 2
        %v377 = vsel %vm357, %v374, %v376
        %v378 = vrot.slane %v226, 2
        %v379 = vrot.slane %v227, 2
        %v380 = vsel %vm357, %v378, %v379
        %v381 = vrot.slane %v228, 2
        %v382 = vsel %vm357, %v379, %v381
        %v383 = vrot.slane %v229, 2
        %v384 = vrot.slane %v230, 2
        %v385 = vsel %vm357, %v383, %v384
        %v386 = vrot.slane %v231, 2
        %v387 = vsel %vm357, %v384, %v386
        %v388 = vrot.slane %v232, 2
        %v389 = vrot.slane %v233, 2
        %v390 = vsel %vm357, %v388, %v389
        %v391 = vrot.slane %v234, 2
        %v392 = vsel %vm357, %v389, %v391
        %v393 = vrot.slane %v235, 2
        %v394 = vrot.slane %v236, 2
        %v395 = vsel %vm357, %v393, %v394
        %v396 = vrot.slane %v237, 2
        %v397 = vsel %vm357, %v394, %v396
        %398 = vrot.lane.b32.xlu0 %v360, 8
        %v399 = vpop.permute.xlu0 %398
        %400 = vrot.lane.b32.xlu0 %v362, 8
        %v401 = vpop.permute.xlu0 %400
        %402 = vrot.lane.b32.xlu0 %v365, 8
        %v403 = vpop.permute.xlu0 %402
        %404 = vrot.lane.b32.xlu0 %v367, 8
        %v405 = vpop.permute.xlu0 %404
        %406 = vrot.lane.b32.xlu0 %v370, 8
        %v407 = vpop.permute.xlu0 %406
        %408 = vrot.lane.b32.xlu0 %v372, 8
        %v409 = vpop.permute.xlu0 %408
        %410 = vrot.lane.b32.xlu0 %v375, 8
        %v411 = vpop.permute.xlu0 %410
        %412 = vrot.lane.b32.xlu0 %v377, 8
        %v413 = vpop.permute.xlu0 %412
        %414 = vrot.lane.b32.xlu0 %v380, 8
        %v415 = vpop.permute.xlu0 %414
        %416 = vrot.lane.b32.xlu0 %v382, 8
        %v417 = vpop.permute.xlu0 %416
        %418 = vrot.lane.b32.xlu0 %v385, 8
        %v419 = vpop.permute.xlu0 %418
        %420 = vrot.lane.b32.xlu0 %v387, 8
        %v421 = vpop.permute.xlu0 %420
        %422 = vrot.lane.b32.xlu0 %v390, 8
        %v423 = vpop.permute.xlu0 %422
        %424 = vrot.lane.b32.xlu0 %v392, 8
        %v425 = vpop.permute.xlu0 %424
        %426 = vrot.lane.b32.xlu0 %v395, 8
        %v427 = vpop.permute.xlu0 %426
        %428 = vrot.lane.b32.xlu0 %v397, 8
        %v429 = vpop.permute.xlu0 %428
        %448 = vrot.lane.b32.xlu0 %v217, 12
        %v449 = vpop.permute.xlu0 %448
        %450 = vrot.lane.b32.xlu0 %v218, 12
        %v451 = vpop.permute.xlu0 %450
        %452 = vrot.lane.b32.xlu0 %v220, 12
        %v453 = vpop.permute.xlu0 %452
        %454 = vrot.lane.b32.xlu0 %v221, 12
        %v455 = vpop.permute.xlu0 %454
        %456 = vrot.lane.b32.xlu0 %v223, 12
        %v457 = vpop.permute.xlu0 %456
        %458 = vrot.lane.b32.xlu0 %v224, 12
        %v459 = vpop.permute.xlu0 %458
        %460 = vrot.lane.b32.xlu0 %v226, 12
        %v461 = vpop.permute.xlu0 %460
        %462 = vrot.lane.b32.xlu0 %v227, 12
        %v463 = vpop.permute.xlu0 %462
        %464 = vrot.lane.b32.xlu0 %v229, 12
        %v465 = vpop.permute.xlu0 %464
        %466 = vrot.lane.b32.xlu0 %v230, 12
        %v467 = vpop.permute.xlu0 %466
        %468 = vrot.lane.b32.xlu0 %v232, 12
        %v469 = vpop.permute.xlu0 %468
        %470 = vrot.lane.b32.xlu0 %v233, 12
        %v471 = vpop.permute.xlu0 %470
        %472 = vrot.lane.b32.xlu0 %v235, 12
        %v473 = vpop.permute.xlu0 %472
        %474 = vrot.lane.b32.xlu0 %v236, 12
        %v475 = vpop.permute.xlu0 %474
        %476 = vrot.lane.b32.xlu0 %v238, 12
        %v477 = vpop.permute.xlu0 %476
        %478 = vrot.lane.b32.xlu0 %v239, 12
        %v479 = vpop.permute.xlu0 %478
        %v497 = vrot.slane %v238, 1
        %v498 = vrot.slane %v239, 1
        %v499 = vsel %vm268, %v497, %v498
        %v500 = vrot.slane %v240, 1
        %v501 = vsel %vm268, %v498, %v500
        %502 = vrot.lane.b32.xlu0 %v276, 16
        %v503 = vpop.permute.xlu0 %502
        %504 = vrot.lane.b32.xlu0 %v278, 16
        %v505 = vpop.permute.xlu0 %504
        %506 = vrot.lane.b32.xlu0 %v281, 16
        %v507 = vpop.permute.xlu0 %506
        %508 = vrot.lane.b32.xlu0 %v283, 16
        %v509 = vpop.permute.xlu0 %508
        %510 = vrot.lane.b32.xlu0 %v286, 16
        %v511 = vpop.permute.xlu0 %510
        %512 = vrot.lane.b32.xlu0 %v288, 16
        %v513 = vpop.permute.xlu0 %512
        %514 = vrot.lane.b32.xlu0 %v291, 16
        %v515 = vpop.permute.xlu0 %514
        %516 = vrot.lane.b32.xlu0 %v293, 16
        %v517 = vpop.permute.xlu0 %516
        %518 = vrot.lane.b32.xlu0 %v296, 16
        %v519 = vpop.permute.xlu0 %518
        %520 = vrot.lane.b32.xlu0 %v298, 16
        %v521 = vpop.permute.xlu0 %520
        %522 = vrot.lane.b32.xlu0 %v301, 16
        %v523 = vpop.permute.xlu0 %522
        %524 = vrot.lane.b32.xlu0 %v303, 16
        %v525 = vpop.permute.xlu0 %524
        %526 = vrot.lane.b32.xlu0 %v306, 16
        %v527 = vpop.permute.xlu0 %526
        %528 = vrot.lane.b32.xlu0 %v308, 16
        %v529 = vpop.permute.xlu0 %528
        %530 = vrot.lane.b32.xlu0 %v499, 16
        %v531 = vpop.permute.xlu0 %530
        %532 = vrot.lane.b32.xlu0 %v501, 16
        %v533 = vpop.permute.xlu0 %532
        %v550 = vrot.slane %v238, 2
        %v551 = vrot.slane %v239, 2
        %v552 = vsel %vm357, %v550, %v551
        %v553 = vrot.slane %v240, 2
        %v554 = vsel %vm357, %v551, %v553
        %555 = vrot.lane.b32.xlu0 %v365, 20
        %v556 = vpop.permute.xlu0 %555
        %557 = vrot.lane.b32.xlu0 %v367, 20
        %v558 = vpop.permute.xlu0 %557
        %559 = vrot.lane.b32.xlu0 %v370, 20
        %v560 = vpop.permute.xlu0 %559
        %561 = vrot.lane.b32.xlu0 %v372, 20
        %v562 = vpop.permute.xlu0 %561
        %563 = vrot.lane.b32.xlu0 %v375, 20
        %v564 = vpop.permute.xlu0 %563
        %565 = vrot.lane.b32.xlu0 %v377, 20
        %v566 = vpop.permute.xlu0 %565
        %567 = vrot.lane.b32.xlu0 %v380, 20
        %v568 = vpop.permute.xlu0 %567
        %569 = vrot.lane.b32.xlu0 %v382, 20
        %v570 = vpop.permute.xlu0 %569
        %571 = vrot.lane.b32.xlu0 %v385, 20
        %v572 = vpop.permute.xlu0 %571
        %573 = vrot.lane.b32.xlu0 %v387, 20
        %v574 = vpop.permute.xlu0 %573
        %575 = vrot.lane.b32.xlu0 %v390, 20
        %v576 = vpop.permute.xlu0 %575
        %577 = vrot.lane.b32.xlu0 %v392, 20
        %v578 = vpop.permute.xlu0 %577
        %579 = vrot.lane.b32.xlu0 %v395, 20
        %v580 = vpop.permute.xlu0 %579
        %581 = vrot.lane.b32.xlu0 %v397, 20
        %v582 = vpop.permute.xlu0 %581
        %583 = vrot.lane.b32.xlu0 %v552, 20
        %v584 = vpop.permute.xlu0 %583
        %585 = vrot.lane.b32.xlu0 %v554, 20
        %v586 = vpop.permute.xlu0 %585
        %605 = vrot.lane.b32.xlu0 %v220, 24
        %v606 = vpop.permute.xlu0 %605
        %607 = vrot.lane.b32.xlu0 %v221, 24
        %v608 = vpop.permute.xlu0 %607
        %609 = vrot.lane.b32.xlu0 %v223, 24
        %v610 = vpop.permute.xlu0 %609
        %611 = vrot.lane.b32.xlu0 %v224, 24
        %v612 = vpop.permute.xlu0 %611
        %613 = vrot.lane.b32.xlu0 %v226, 24
        %v614 = vpop.permute.xlu0 %613
        %615 = vrot.lane.b32.xlu0 %v227, 24
        %v616 = vpop.permute.xlu0 %615
        %617 = vrot.lane.b32.xlu0 %v229, 24
        %v618 = vpop.permute.xlu0 %617
        %619 = vrot.lane.b32.xlu0 %v230, 24
        %v620 = vpop.permute.xlu0 %619
        %621 = vrot.lane.b32.xlu0 %v232, 24
        %v622 = vpop.permute.xlu0 %621
        %623 = vrot.lane.b32.xlu0 %v233, 24
        %v624 = vpop.permute.xlu0 %623
        %625 = vrot.lane.b32.xlu0 %v235, 24
        %v626 = vpop.permute.xlu0 %625
        %627 = vrot.lane.b32.xlu0 %v236, 24
        %v628 = vpop.permute.xlu0 %627
        %629 = vrot.lane.b32.xlu0 %v238, 24
        %v630 = vpop.permute.xlu0 %629
        %631 = vrot.lane.b32.xlu0 %v239, 24
        %v632 = vpop.permute.xlu0 %631
        %633 = vrot.lane.b32.xlu0 %v241, 24
        %v634 = vpop.permute.xlu0 %633
        %635 = vrot.lane.b32.xlu0 %v242, 24
        %v636 = vpop.permute.xlu0 %635
        %v654 = vrot.slane %v241, 1
        %v655 = vrot.slane %v242, 1
        %v656 = vsel %vm268, %v654, %v655
        %v657 = vrot.slane %v243, 1
        %v658 = vsel %vm268, %v655, %v657
        %659 = vrot.lane.b32.xlu0 %v281, 28
        %v660 = vpop.permute.xlu0 %659
        %661 = vrot.lane.b32.xlu0 %v283, 28
        %v662 = vpop.permute.xlu0 %661
        %663 = vrot.lane.b32.xlu0 %v286, 28
        %v664 = vpop.permute.xlu0 %663
        %665 = vrot.lane.b32.xlu0 %v288, 28
        %v666 = vpop.permute.xlu0 %665
        %667 = vrot.lane.b32.xlu0 %v291, 28
        %v668 = vpop.permute.xlu0 %667
        %669 = vrot.lane.b32.xlu0 %v293, 28
        %v670 = vpop.permute.xlu0 %669
        %671 = vrot.lane.b32.xlu0 %v296, 28
        %v672 = vpop.permute.xlu0 %671
        %673 = vrot.lane.b32.xlu0 %v298, 28
        %v674 = vpop.permute.xlu0 %673
        %675 = vrot.lane.b32.xlu0 %v301, 28
        %v676 = vpop.permute.xlu0 %675
        %677 = vrot.lane.b32.xlu0 %v303, 28
        %v678 = vpop.permute.xlu0 %677
        %679 = vrot.lane.b32.xlu0 %v306, 28
        %v680 = vpop.permute.xlu0 %679
        %681 = vrot.lane.b32.xlu0 %v308, 28
        %v682 = vpop.permute.xlu0 %681
        %683 = vrot.lane.b32.xlu0 %v499, 28
        %v684 = vpop.permute.xlu0 %683
        %685 = vrot.lane.b32.xlu0 %v501, 28
        %v686 = vpop.permute.xlu0 %685
        %687 = vrot.lane.b32.xlu0 %v656, 28
        %v688 = vpop.permute.xlu0 %687
        %689 = vrot.lane.b32.xlu0 %v658, 28
        %v690 = vpop.permute.xlu0 %689
        %v707 = vrot.slane %v241, 2
        %v708 = vrot.slane %v242, 2
        %v709 = vsel %vm357, %v707, %v708
        %v710 = vrot.slane %v243, 2
        %v711 = vsel %vm357, %v708, %v710
        %712 = vrot.lane.b32.xlu0 %v370, 32
        %v713 = vpop.permute.xlu0 %712
        %714 = vrot.lane.b32.xlu0 %v372, 32
        %v715 = vpop.permute.xlu0 %714
        %716 = vrot.lane.b32.xlu0 %v375, 32
        %v717 = vpop.permute.xlu0 %716
        %718 = vrot.lane.b32.xlu0 %v377, 32
        %v719 = vpop.permute.xlu0 %718
        %720 = vrot.lane.b32.xlu0 %v380, 32
        %v721 = vpop.permute.xlu0 %720
        %722 = vrot.lane.b32.xlu0 %v382, 32
        %v723 = vpop.permute.xlu0 %722
        %724 = vrot.lane.b32.xlu0 %v385, 32
        %v725 = vpop.permute.xlu0 %724
        %726 = vrot.lane.b32.xlu0 %v387, 32
        %v727 = vpop.permute.xlu0 %726
        %728 = vrot.lane.b32.xlu0 %v390, 32
        %v729 = vpop.permute.xlu0 %728
        %730 = vrot.lane.b32.xlu0 %v392, 32
        %v731 = vpop.permute.xlu0 %730
        %732 = vrot.lane.b32.xlu0 %v395, 32
        %v733 = vpop.permute.xlu0 %732
        %734 = vrot.lane.b32.xlu0 %v397, 32
        %v735 = vpop.permute.xlu0 %734
        %736 = vrot.lane.b32.xlu0 %v552, 32
        %v737 = vpop.permute.xlu0 %736
        %738 = vrot.lane.b32.xlu0 %v554, 32
        %v739 = vpop.permute.xlu0 %738
        %740 = vrot.lane.b32.xlu0 %v709, 32
        %v741 = vpop.permute.xlu0 %740
        %742 = vrot.lane.b32.xlu0 %v711, 32
        %v743 = vpop.permute.xlu0 %742
        %vm760 = vcmask 31744
        %v761 = vsel %vm760, %v214, %v310
        %v762 = vsel %vm760, %v215, %v312
        %v763 = vsel %vm760, %v217, %v314
        %v764 = vsel %vm760, %v218, %v316
        %v765 = vsel %vm760, %v220, %v318
        %v766 = vsel %vm760, %v221, %v320
        %v767 = vsel %vm760, %v223, %v322
        %v768 = vsel %vm760, %v224, %v324
        %v769 = vsel %vm760, %v226, %v326
        %v770 = vsel %vm760, %v227, %v328
        %v771 = vsel %vm760, %v229, %v330
        %v772 = vsel %vm760, %v230, %v332
        %v773 = vsel %vm760, %v232, %v334
        %v774 = vsel %vm760, %v233, %v336
        %v775 = vsel %vm760, %v235, %v338
        %v776 = vsel %vm760, %v236, %v340
        %vm777 = vcmask 64512
        %v778 = vsel %vm777, %v761, %v399
        %v779 = vsel %vm777, %v762, %v401
        %v780 = vsel %vm777, %v763, %v403
        %v781 = vsel %vm777, %v764, %v405
        %v782 = vsel %vm777, %v765, %v407
        %v783 = vsel %vm777, %v766, %v409
        %v784 = vsel %vm777, %v767, %v411
        %v785 = vsel %vm777, %v768, %v413
        %v786 = vsel %vm777, %v769, %v415
        %v787 = vsel %vm777, %v770, %v417
        %v788 = vsel %vm777, %v771, %v419
        %v789 = vsel %vm777, %v772, %v421
        %v790 = vsel %vm777, %v773, %v423
        %v791 = vsel %vm777, %v774, %v425
        %v792 = vsel %vm777, %v775, %v427
        %v793 = vsel %vm777, %v776, %v429
        %vm794 = vcmask 97280
        %v795 = vsel %vm794, %v778, %v449
        %v796 = vsel %vm794, %v779, %v451
        %v797 = vsel %vm794, %v780, %v453
        %v798 = vsel %vm794, %v781, %v455
        %v799 = vsel %vm794, %v782, %v457
        %v800 = vsel %vm794, %v783, %v459
        %v801 = vsel %vm794, %v784, %v461
        %v802 = vsel %vm794, %v785, %v463
        %v803 = vsel %vm794, %v786, %v465
        %v804 = vsel %vm794, %v787, %v467
        %v805 = vsel %vm794, %v788, %v469
        %v806 = vsel %vm794, %v789, %v471
        %v807 = vsel %vm794, %v790, %v473
        %v808 = vsel %vm794, %v791, %v475
        %v809 = vsel %vm794, %v792, %v477
        %v810 = vsel %vm794, %v793, %v479
        %vm811 = vcmask 130048
        %v812 = vsel %vm811, %v795, %v503
        %v813 = vsel %vm811, %v796, %v505
        %v814 = vsel %vm811, %v797, %v507
        %v815 = vsel %vm811, %v798, %v509
        %v816 = vsel %vm811, %v799, %v511
        %v817 = vsel %vm811, %v800, %v513
        %v818 = vsel %vm811, %v801, %v515
        %v819 = vsel %vm811, %v802, %v517
        %v820 = vsel %vm811, %v803, %v519
        %v821 = vsel %vm811, %v804, %v521
        %v822 = vsel %vm811, %v805, %v523
        %v823 = vsel %vm811, %v806, %v525
        %v824 = vsel %vm811, %v807, %v527
        %v825 = vsel %vm811, %v808, %v529
        %v826 = vsel %vm811, %v809, %v531
        %v827 = vsel %vm811, %v810, %v533
        %vm828 = vcmask 162816
        %v829 = vsel %vm828, %v812, %v556
        %v830 = vsel %vm828, %v813, %v558
        %v831 = vsel %vm828, %v814, %v560
        %v832 = vsel %vm828, %v815, %v562
        %v833 = vsel %vm828, %v816, %v564
        %v834 = vsel %vm828, %v817, %v566
        %v835 = vsel %vm828, %v818, %v568
        %v836 = vsel %vm828, %v819, %v570
        %v837 = vsel %vm828, %v820, %v572
        %v838 = vsel %vm828, %v821, %v574
        %v839 = vsel %vm828, %v822, %v576
        %v840 = vsel %vm828, %v823, %v578
        %v841 = vsel %vm828, %v824, %v580
        %v842 = vsel %vm828, %v825, %v582
        %v843 = vsel %vm828, %v826, %v584
        %v844 = vsel %vm828, %v827, %v586
        %vm845 = vcmask 195584
        %v846 = vsel %vm845, %v829, %v606
        %v847 = vsel %vm845, %v830, %v608
        %v848 = vsel %vm845, %v831, %v610
        %v849 = vsel %vm845, %v832, %v612
        %v850 = vsel %vm845, %v833, %v614
        %v851 = vsel %vm845, %v834, %v616
        %v852 = vsel %vm845, %v835, %v618
        %v853 = vsel %vm845, %v836, %v620
        %v854 = vsel %vm845, %v837, %v622
        %v855 = vsel %vm845, %v838, %v624
        %v856 = vsel %vm845, %v839, %v626
        %v857 = vsel %vm845, %v840, %v628
        %v858 = vsel %vm845, %v841, %v630
        %v859 = vsel %vm845, %v842, %v632
        %v860 = vsel %vm845, %v843, %v634
        %v861 = vsel %vm845, %v844, %v636
        %vm862 = vcmask 228352
        %v863 = vsel %vm862, %v846, %v660
        %v864 = vsel %vm862, %v847, %v662
        %v865 = vsel %vm862, %v848, %v664
        %v866 = vsel %vm862, %v849, %v666
        %v867 = vsel %vm862, %v850, %v668
        %v868 = vsel %vm862, %v851, %v670
        %v869 = vsel %vm862, %v852, %v672
        %v870 = vsel %vm862, %v853, %v674
        %v871 = vsel %vm862, %v854, %v676
        %v872 = vsel %vm862, %v855, %v678
        %v873 = vsel %vm862, %v856, %v680
        %v874 = vsel %vm862, %v857, %v682
        %v875 = vsel %vm862, %v858, %v684
        %v876 = vsel %vm862, %v859, %v686
        %v877 = vsel %vm862, %v860, %v688
        %v878 = vsel %vm862, %v861, %v690
        %vm879 = vcmask 261120
        %v880 = vsel %vm879, %v863, %v713
        %v881 = vsel %vm879, %v864, %v715
        %v882 = vsel %vm879, %v865, %v717
        %v883 = vsel %vm879, %v866, %v719
        %v884 = vsel %vm879, %v867, %v721
        %v885 = vsel %vm879, %v868, %v723
        %v886 = vsel %vm879, %v869, %v725
        %v887 = vsel %vm879, %v870, %v727
        %v888 = vsel %vm879, %v871, %v729
        %v889 = vsel %vm879, %v872, %v731
        %v890 = vsel %vm879, %v873, %v733
        %v891 = vsel %vm879, %v874, %v735
        %v892 = vsel %vm879, %v875, %v737
        %v893 = vsel %vm879, %v876, %v739
        %v894 = vsel %vm879, %v877, %v741
        %v895 = vsel %vm879, %v878, %v743
        %v896 = vld [vmem:[%s1] sm:$0xff]
        %v897 = vld [vmem:[%s1 + $0x8] sm:$0xff]
        %v898 = vld [vmem:[%s1 + $0x10] sm:$0xff]
        %v899 = vld [vmem:[%s1 + $0x18] sm:$0xff]
        %v900 = vld [vmem:[%s1 + $0x20] sm:$0xf]
        %vm901 = vcmask 293888
        %v903 = vsel %vm901, %v880, 0
        %v906 = vsel %vm901, %v881, 0
        %v909 = vsel %vm901, %v882, 0
        %v912 = vsel %vm901, %v883, 0
        %v915 = vsel %vm901, %v884, 0
        %v918 = vsel %vm901, %v885, 0
        %v921 = vsel %vm901, %v886, 0
        %v924 = vsel %vm901, %v887, 0
        %v927 = vsel %vm901, %v888, 0
        %v930 = vsel %vm901, %v889, 0
        %v933 = vsel %vm901, %v890, 0
        %v936 = vsel %vm901, %v891, 0
        %v939 = vsel %vm901, %v892, 0
        %v942 = vsel %vm901, %v893, 0
        %v945 = vsel %vm901, %v894, 0
        %v948 = vsel %vm901, %v895, 0
        %vm950 = vcmask 1043456
        %v952 = vsel %vm950, %v900, 0
        %954 = vmatprep.subr.mxu0 0.0
        %955 = vmatpush1.msra.mxu0 %v896
        %956 = vmatprep.subr.mxu0 0.0
        %957 = vmatpush1.msra.mxu0 %v897
        %958 = vmatprep.subr.mxu0 0.0
        %959 = vmatpush1.msra.mxu0 %v898
        %960 = vmatprep.subr.mxu0 0.0
        %961 = vmatpush1.msra.mxu0 %v899
        %962 = vmatprep.subr.mxu0 0.0
        %963 = vmatpush1.msra.mxu0 %v952
        %964 = vmatprep.subr.mxu0 0.0
        %965 = vmatpush1.msra.mxu0 0.0
        %966 = vmatprep.subr.mxu0 0.0
        %967 = vmatpush1.msra.mxu0 0.0
        %968 = vmatprep.subr.mxu0 0.0
        %969 = vmatpush1.msra.mxu0 0.0
        %970 = vmatprep.subr.mxu0 0.0
        %971 = vmatpush1.msra.mxu0 0.0
        %972 = vmatprep.subr.mxu0 0.0
        %973 = vmatpush1.msra.mxu0 0.0
        %974 = vmatprep.subr.mxu0 0.0
        %975 = vmatpush1.msra.mxu0 0.0
        %976 = vmatprep.subr.mxu0 0.0
        %977 = vmatpush1.msra.mxu0 0.0
        %978 = vmatprep.subr.mxu0 0.0
        %979 = vmatpush1.msra.mxu0 0.0
        %980 = vmatprep.subr.mxu0 0.0
        %981 = vmatpush1.msra.mxu0 0.0
        %982 = vmatprep.subr.mxu0 0.0
        %983 = vmatpush1.msra.mxu0 0.0
        %984 = vmatprep.subr.mxu0 0.0
        %985 = vmatpush1.msra.mxu0 0.0
        %986 = vmatprep.subr.mxu0 0.0
        %987 = vmatpush1.msra.mxu0 0.0
        %988 = vmatprep.subr.mxu0 0.0
        %989 = vmatpush1.msra.mxu0 0.0
        %990 = vmatprep.subr.mxu0 0.0
        %991 = vmatpush1.msra.mxu0 0.0
        %992 = vmatprep.subr.mxu0 0.0
        %993 = vmatpush1.msra.mxu0 0.0
        %994 = vmatprep.subr.mxu0 0.0
        %995 = vmatpush1.msra.mxu0 0.0
        %996 = vmatprep.subr.mxu0 0.0
        %997 = vmatpush1.msra.mxu0 0.0
        %998 = vmatprep.subr.mxu0 0.0
        %999 = vmatpush1.msra.mxu0 0.0
        %1000 = vmatprep.subr.mxu0 0.0
        %1001 = vmatpush1.msra.mxu0 0.0
        %1002 = vmatprep.subr.mxu0 0.0
        %1003 = vmatpush1.msra.mxu0 0.0
        %1004 = vmatprep.subr.mxu0 0.0
        %1005 = vmatpush1.msra.mxu0 0.0
        %1006 = vmatprep.subr.mxu0 0.0
        %1007 = vmatpush1.msra.mxu0 0.0
        %1008 = vmatprep.subr.mxu0 0.0
        %1009 = vmatpush1.msra.mxu0 0.0
        %1010 = vmatprep.subr.mxu0 0.0
        %1011 = vmatpush1.msra.mxu0 0.0
        %1012 = vmatprep.subr.mxu0 0.0
        %1013 = vmatpush1.msra.mxu0 0.0
        %1014 = vmatprep.subr.mxu0 0.0
        %1015 = vmatpush1.msra.mxu0 0.0
        %1016 = vmatprep.subr.mxu0 0.0
        %1017 = vmatpush1.msra.mxu0 0.0
        %1018 = vmatprep.mubr.f32.mxu0 0.0
        %1019 = vmatmul.mubr.f32.gmra.mrb[0].mxu0 %v903
        %v1020 = vpop.f32.mrb[0].mxu0
        %v1021 = vadd.f32 0.0, %v1020
        %v1022 = vpop.f32.mrb[0].mxu0
        %1023 = vmatprep.mubr.f32.mxu0 0.0
        %1024 = vmatmul.mubr.f32.gmra.mrb[0].mxu0 %v906
        %v1025 = vpop.f32.mrb[0].mxu0
        %v1026 = vadd.f32 0.0, %v1025
        %v1027 = vpop.f32.mrb[0].mxu0
        %1028 = vmatprep.mubr.f32.mxu0 0.0
        %1029 = vmatmul.mubr.f32.gmra.mrb[0].mxu0 %v909
        %v1030 = vpop.f32.mrb[0].mxu0
        %v1031 = vadd.f32 0.0, %v1030
        %v1032 = vpop.f32.mrb[0].mxu0
        %1033 = vmatprep.mubr.f32.mxu0 0.0
        %1034 = vmatmul.mubr.f32.gmra.mrb[0].mxu0 %v912
        %v1035 = vpop.f32.mrb[0].mxu0
        %v1036 = vadd.f32 0.0, %v1035
        %v1037 = vpop.f32.mrb[0].mxu0
        %1038 = vmatprep.mubr.f32.mxu0 0.0
        %1039 = vmatmul.mubr.f32.gmra.mrb[0].mxu0 %v915
        %v1040 = vpop.f32.mrb[0].mxu0
        %v1041 = vadd.f32 0.0, %v1040
        %v1042 = vpop.f32.mrb[0].mxu0
        %1043 = vmatprep.mubr.f32.mxu0 0.0
        %1044 = vmatmul.mubr.f32.gmra.mrb[0].mxu0 %v918
        %v1045 = vpop.f32.mrb[0].mxu0
        %v1046 = vadd.f32 0.0, %v1045
        %v1047 = vpop.f32.mrb[0].mxu0
        %1048 = vmatprep.mubr.f32.mxu0 0.0
        %1049 = vmatmul.mubr.f32.gmra.mrb[0].mxu0 %v921
        %v1050 = vpop.f32.mrb[0].mxu0
        %v1051 = vadd.f32 0.0, %v1050
        %v1052 = vpop.f32.mrb[0].mxu0
        %1053 = vmatprep.mubr.f32.mxu0 0.0
        %1054 = vmatmul.mubr.f32.gmra.mrb[0].mxu0 %v924
        %v1055 = vpop.f32.mrb[0].mxu0
        %v1056 = vadd.f32 0.0, %v1055
        %v1057 = vpop.f32.mrb[0].mxu0
        %1058 = vmatprep.mubr.f32.mxu0 0.0
        %1059 = vmatmul.mubr.f32.gmra.mrb[0].mxu0 %v927
        %v1060 = vpop.f32.mrb[0].mxu0
        %v1061 = vadd.f32 0.0, %v1060
        %v1062 = vpop.f32.mrb[0].mxu0
        %1063 = vmatprep.mubr.f32.mxu0 0.0
        %1064 = vmatmul.mubr.f32.gmra.mrb[0].mxu0 %v930
        %v1065 = vpop.f32.mrb[0].mxu0
        %v1066 = vadd.f32 0.0, %v1065
        %v1067 = vpop.f32.mrb[0].mxu0
        %1068 = vmatprep.mubr.f32.mxu0 0.0
        %1069 = vmatmul.mubr.f32.gmra.mrb[0].mxu0 %v933
        %v1070 = vpop.f32.mrb[0].mxu0
        %v1071 = vadd.f32 0.0, %v1070
        %v1072 = vpop.f32.mrb[0].mxu0
        %1073 = vmatprep.mubr.f32.mxu0 0.0
        %1074 = vmatmul.mubr.f32.gmra.mrb[0].mxu0 %v936
        %v1075 = vpop.f32.mrb[0].mxu0
        %v1076 = vadd.f32 0.0, %v1075
        %v1077 = vpop.f32.mrb[0].mxu0
        %1078 = vmatprep.mubr.f32.mxu0 0.0
        %1079 = vmatmul.mubr.f32.gmra.mrb[0].mxu0 %v939
        %v1080 = vpop.f32.mrb[0].mxu0
        %v1081 = vadd.f32 0.0, %v1080
        %v1082 = vpop.f32.mrb[0].mxu0
        %1083 = vmatprep.mubr.f32.mxu0 0.0
        %1084 = vmatmul.mubr.f32.gmra.mrb[0].mxu0 %v942
        %v1085 = vpop.f32.mrb[0].mxu0
        %v1086 = vadd.f32 0.0, %v1085
        %v1087 = vpop.f32.mrb[0].mxu0
        %1088 = vmatprep.mubr.f32.mxu0 0.0
        %1089 = vmatmul.mubr.f32.gmra.mrb[0].mxu0 %v945
        %v1090 = vpop.f32.mrb[0].mxu0
        %v1091 = vadd.f32 0.0, %v1090
        %v1092 = vpop.f32.mrb[0].mxu0
        %1093 = vmatprep.mubr.f32.mxu0 0.0
        %1094 = vmatmul.mubr.f32.gmra.mrb[0].mxu0 %v948
        %v1095 = vpop.f32.mrb[0].mxu0
        %v1096 = vadd.f32 0.0, %v1095
        %v1097 = vpop.f32.mrb[0].mxu0
        %1098 = vdwg.mxu0
        %v1099 = vld [vmem:[%s2] sm:$0x1]
        %v1101 = vlaneseq
        %v1102 = vshrl.u32 %v1101, 7
        %v1103 = vsub.s32 0, %v1102
        %v1104 = vrot.slane %v1099, %v1103
        %v1106 = vmul.f32 %v1021, %v1104
        %v1107 = vmul.f32 %v1026, %v1104
        %v1108 = vmul.f32 %v1031, %v1104
        %v1109 = vmul.f32 %v1036, %v1104
        %v1110 = vmul.f32 %v1041, %v1104
        %v1111 = vmul.f32 %v1046, %v1104
        %v1112 = vmul.f32 %v1051, %v1104
        %v1113 = vmul.f32 %v1056, %v1104
        %v1114 = vmul.f32 %v1061, %v1104
        %v1115 = vmul.f32 %v1066, %v1104
        %v1116 = vmul.f32 %v1071, %v1104
        %v1117 = vmul.f32 %v1076, %v1104
        %v1118 = vmul.f32 %v1081, %v1104
        %v1119 = vmul.f32 %v1086, %v1104
        %v1120 = vmul.f32 %v1091, %v1104
        %v1121 = vmul.f32 %v1096, %v1104
        %v1122 = vld [vmem:[%s3] sm:$0x1]
        %v1124 = vlaneseq
        %v1125 = vshrl.u32 %v1124, 7
        %v1126 = vsub.s32 0, %v1125
        %v1127 = vrot.slane %v1122, %v1126
        %v1129 = vadd.f32 %v1106, %v1127
        %v1130 = vadd.f32 %v1107, %v1127
        %v1131 = vadd.f32 %v1108, %v1127
        %v1132 = vadd.f32 %v1109, %v1127
        %v1133 = vadd.f32 %v1110, %v1127
        %v1134 = vadd.f32 %v1111, %v1127
        %v1135 = vadd.f32 %v1112, %v1127
        %v1136 = vadd.f32 %v1113, %v1127
        %v1137 = vadd.f32 %v1114, %v1127
        %v1138 = vadd.f32 %v1115, %v1127
        %v1139 = vadd.f32 %v1116, %v1127
        %v1140 = vadd.f32 %v1117, %v1127
        %v1141 = vadd.f32 %v1118, %v1127
        %v1142 = vadd.f32 %v1119, %v1127
        %v1143 = vadd.f32 %v1120, %v1127
        %v1144 = vadd.f32 %v1121, %v1127
        %v1145 = vxor.u32 %v1129, 2147483648
        %v1146 = vxor.u32 %v1130, 2147483648
        %v1147 = vxor.u32 %v1131, 2147483648
        %v1148 = vxor.u32 %v1132, 2147483648
        %v1149 = vxor.u32 %v1133, 2147483648
        %v1150 = vxor.u32 %v1134, 2147483648
        %v1151 = vxor.u32 %v1135, 2147483648
        %v1152 = vxor.u32 %v1136, 2147483648
        %v1153 = vxor.u32 %v1137, 2147483648
        %v1154 = vxor.u32 %v1138, 2147483648
        %v1155 = vxor.u32 %v1139, 2147483648
        %v1156 = vxor.u32 %v1140, 2147483648
        %v1157 = vxor.u32 %v1141, 2147483648
        %v1158 = vxor.u32 %v1142, 2147483648
        %v1159 = vxor.u32 %v1143, 2147483648
        %v1160 = vxor.u32 %v1144, 2147483648
        %v1161 = vmul.f32 %v1145, 1.442695
        %v1162 = vpow.pop %v1161
        %v1163 = vmul.f32 %v1146, 1.442695
        %v1164 = vpow.pop %v1163
        %v1165 = vmul.f32 %v1147, 1.442695
        %v1166 = vpow.pop %v1165
        %v1167 = vmul.f32 %v1148, 1.442695
        %v1168 = vpow.pop %v1167
        %v1169 = vmul.f32 %v1149, 1.442695
        %v1170 = vpow.pop %v1169
        %v1171 = vmul.f32 %v1150, 1.442695
        %v1172 = vpow.pop %v1171
        %v1173 = vmul.f32 %v1151, 1.442695
        %v1174 = vpow.pop %v1173
        %v1175 = vmul.f32 %v1152, 1.442695
        %v1176 = vpow.pop %v1175
        %v1177 = vmul.f32 %v1153, 1.442695
        %v1178 = vpow.pop %v1177
        %v1179 = vmul.f32 %v1154, 1.442695
        %v1180 = vpow.pop %v1179
        %v1181 = vmul.f32 %v1155, 1.442695
        %v1182 = vpow.pop %v1181
        %v1183 = vmul.f32 %v1156, 1.442695
        %v1184 = vpow.pop %v1183
        %v1185 = vmul.f32 %v1157, 1.442695
        %v1186 = vpow.pop %v1185
        %v1187 = vmul.f32 %v1158, 1.442695
        %v1188 = vpow.pop %v1187
        %v1189 = vmul.f32 %v1159, 1.442695
        %v1190 = vpow.pop %v1189
        %v1191 = vmul.f32 %v1160, 1.442695
        %v1192 = vpow.pop %v1191
        %v1193 = vadd.f32 %v1162, 1.0
        %v1194 = vadd.f32 %v1164, 1.0
        %v1195 = vadd.f32 %v1166, 1.0
        %v1196 = vadd.f32 %v1168, 1.0
        %v1197 = vadd.f32 %v1170, 1.0
        %v1198 = vadd.f32 %v1172, 1.0
        %v1199 = vadd.f32 %v1174, 1.0
        %v1200 = vadd.f32 %v1176, 1.0
        %v1201 = vadd.f32 %v1178, 1.0
        %v1202 = vadd.f32 %v1180, 1.0
        %v1203 = vadd.f32 %v1182, 1.0
        %v1204 = vadd.f32 %v1184, 1.0
        %v1205 = vadd.f32 %v1186, 1.0
        %v1206 = vadd.f32 %v1188, 1.0
        %v1207 = vadd.f32 %v1190, 1.0
        %v1208 = vadd.f32 %v1192, 1.0
        %v1209 = vrcp.pop %v1193
        %v1210 = vmul.f32 1.0, %v1209
        %v1211 = vrcp.pop %v1194
        %v1212 = vmul.f32 1.0, %v1211
        %v1213 = vrcp.pop %v1195
        %v1214 = vmul.f32 1.0, %v1213
        %v1215 = vrcp.pop %v1196
        %v1216 = vmul.f32 1.0, %v1215
        %v1217 = vrcp.pop %v1197
        %v1218 = vmul.f32 1.0, %v1217
        %v1219 = vrcp.pop %v1198
        %v1220 = vmul.f32 1.0, %v1219
        %v1221 = vrcp.pop %v1199
        %v1222 = vmul.f32 1.0, %v1221
        %v1223 = vrcp.pop %v1200
        %v1224 = vmul.f32 1.0, %v1223
        %v1225 = vrcp.pop %v1201
        %v1226 = vmul.f32 1.0, %v1225
        %v1227 = vrcp.pop %v1202
        %v1228 = vmul.f32 1.0, %v1227
        %v1229 = vrcp.pop %v1203
        %v1230 = vmul.f32 1.0, %v1229
        %v1231 = vrcp.pop %v1204
        %v1232 = vmul.f32 1.0, %v1231
        %v1233 = vrcp.pop %v1205
        %v1234 = vmul.f32 1.0, %v1233
        %v1235 = vrcp.pop %v1206
        %v1236 = vmul.f32 1.0, %v1235
        %v1237 = vrcp.pop %v1207
        %v1238 = vmul.f32 1.0, %v1237
        %v1239 = vrcp.pop %v1208
        %v1240 = vmul.f32 1.0, %v1239
        %v1241 = vmul.f32 %v1129, %v1210
        %v1242 = vmul.f32 %v1130, %v1212
        %v1243 = vmul.f32 %v1131, %v1214
        %v1244 = vmul.f32 %v1132, %v1216
        %v1245 = vmul.f32 %v1133, %v1218
        %v1246 = vmul.f32 %v1134, %v1220
        %v1247 = vmul.f32 %v1135, %v1222
        %v1248 = vmul.f32 %v1136, %v1224
        %v1249 = vmul.f32 %v1137, %v1226
        %v1250 = vmul.f32 %v1138, %v1228
        %v1251 = vmul.f32 %v1139, %v1230
        %v1252 = vmul.f32 %v1140, %v1232
        %v1253 = vmul.f32 %v1141, %v1234
        %v1254 = vmul.f32 %v1142, %v1236
        %v1255 = vmul.f32 %v1143, %v1238
        %v1256 = vmul.f32 %v1144, %v1240
        %1257 = vst [vmem:[%s204] sm:$0xff] %v1241
        %1258 = vst [vmem:[%s204 + $0x8] sm:$0xff] %v1242
        %1259 = vst [vmem:[%s204 + $0x10] sm:$0xff] %v1243
        %1260 = vst [vmem:[%s204 + $0x18] sm:$0xff] %v1244
        %1261 = vst [vmem:[%s204 + $0x20] sm:$0xff] %v1245
        %1262 = vst [vmem:[%s204 + $0x28] sm:$0xff] %v1246
        %1263 = vst [vmem:[%s204 + $0x30] sm:$0xff] %v1247
        %1264 = vst [vmem:[%s204 + $0x38] sm:$0xff] %v1248
        %1265 = vst [vmem:[%s204 + $0x40] sm:$0xff] %v1249
        %1266 = vst [vmem:[%s204 + $0x48] sm:$0xff] %v1250
        %1267 = vst [vmem:[%s204 + $0x50] sm:$0xff] %v1251
        %1268 = vst [vmem:[%s204 + $0x58] sm:$0xff] %v1252
        %1269 = vst [vmem:[%s204 + $0x60] sm:$0xff] %v1253
        %1270 = vst [vmem:[%s204 + $0x68] sm:$0xff] %v1254
        %1271 = vst [vmem:[%s204 + $0x70] sm:$0xff] %v1255
        %1272 = vst [vmem:[%s204 + $0x78] sm:$0xff] %v1256
        %s1273 = sand.u32 %s129, 1
        %s1274 = scalar_lea.sflag [#allocation3], %s1273
        %s1275 = sand.u32 %s129, 1
        %s1276 = smul.addr %s1275, 128
        %s1277 = scalar_lea.vmem [#allocation2], %s1276
        // Predicated region
        $region37: #{tpu_custom_call.1} parent=35 // pred_check
          %p1278 = pneg %p139
        $region38: #{tpu_custom_call.1} parent=35 // pred_check_branch
          %1280 = sbr.rel (%p1278) target = $region40
        $region39: #{tpu_custom_call.1} parent=35 // pred_region
          %s1281 = smul.u32 8, %s23
          %s1283 = ssub.s32 2048, 2048
          %1284 = vsyncadd %s1274, %s1283
          %s1285 = smul.addr %s1281, 2
          %s1286 = smul.addr %s22, 32
          %s1287 = sadd.s32 %s1285, %s1286
          %s1288 = smul.addr %s1287, 128
          %s1289 = scalar_lea.hbm %s4, %s1288
          %s1290 = sshll.u32 %s1277, 4
          %s1291 = int_to_ptr.vmem [resolvable:$true] %s1290
          %1296 = dma.vmem_to_hbm [thread:$0]  %s1291, 2048, %s1289, %s1274, 128, 128, 8
        $region40: #{tpu_custom_call.1} parent=35 // pred_fallthru
          _
      $region36: #{tpu_custom_call.1} parent=5 // pred_fallthru
        _
      %p1297 = scmp.le.s32.totalorder 2, %s13
      // Predicated region
      $region41: #{tpu_custom_call.1} parent=5 // pred_check
        %p1298 = pneg %p1297
      $region42: #{tpu_custom_call.1} parent=5 // pred_check_branch
        %1300 = sbr.rel (%p1298) target = $region44
      $region43: #{tpu_custom_call.1} parent=5 // pred_region
        %s1301 = ssub.s32 %s13, 2
        // Predicated region
        $region45: #{tpu_custom_call.1} parent=43 // pred_check
          %p1302 = pneg %p145
        $region46: #{tpu_custom_call.1} parent=43 // pred_check_branch
          %1304 = sbr.rel (%p1302) target = $region48
        $region47: #{tpu_custom_call.1} parent=43 // pred_region
          %s1305 = sand.u32 %s130, 1
          %s1306 = scalar_lea.sflag [#allocation3], %s1305
          %s1307 = sand.u32 %s130, 1
          %s1308 = smul.addr %s1307, 128
          %s1309 = scalar_lea.vmem [#allocation2], %s1308
          %1310 = dma.done %s1306, 2048
        $region48: #{tpu_custom_call.1} parent=43 // pred_fallthru
          _
      $region44: #{tpu_custom_call.1} parent=5 // pred_fallthru
        _
    $region6: #{tpu_custom_call.1} parent=1 // loop_footer
      %s17 = sadd.s32 1, %s13
    $region7: #{tpu_custom_call.1} parent=1 // loop_footer_branch
      %12 = sbr.rel target = $region3
    $region8: #{tpu_custom_call.1} parent=1 // loop_exit
      _
    %1311 = vsyncpa [#allocation3], 1
    %s1312 = scalar_lea.sflag [#allocation3], 1
    %1313 = vsyncpa %s1312, 1

</llo_original>
